<compile_context>
chip_gen: v6e
topology: v6e:2x2x1
jax: 0.10.0
libtpu: 0.0.40
codegen_flags: <defaults>
</compile_context>

<pallas_src>
from dataclasses import dataclass

import jax
import jax.numpy as jnp
from jax import lax
from jax.experimental import pallas as pl
from jax.experimental.pallas import tpu as pltpu


# ---------------------------------------------------------------------------
# VMEM budget / tiling helpers
# ---------------------------------------------------------------------------

def _vmem_budget_and_cap():
    """(budget_bytes, physical_cap_bytes), generation-aware."""
    cap = 128 << 20
    try:
        cap = int(pltpu.get_tpu_info().vmem_capacity_bytes)
    except Exception:
        pass
    return max(4 << 20, cap // 4), cap


def _choose_batch_tile(B, per_row_bytes, resident_bytes, budget_bytes, max_tile=2048):
    """Largest multiple-of-8 batch tile fitting the double-buffered VMEM budget."""
    b8 = ((max(B, 1) + 7) // 8) * 8
    avail = max(budget_bytes - resident_bytes, 64 << 10)
    fit = (avail // (2 * max(per_row_bytes, 4))) // 8 * 8  # 2x: double-buffered streams
    tb = max(8, min(b8, max_tile, max(fit, 8)))
    return (tb // 8) * 8


def _dsize(dtype_str):
    return jnp.dtype(dtype_str).itemsize


# ---------------------------------------------------------------------------
# Fused loss kernel builder
# ---------------------------------------------------------------------------

def _build_fused_loss(loss_names, coefficients, arg_info, max_batch_tile=None):
    """Build a jitted fused pallas_call for the registered loss terms.

    arg_info: {kwarg_name: (shape_tuple, dtype_str)} for the needed kwargs.
    Returns (run_fn, needed_kwarg_names). run_fn(*args) -> (unweighted (1,K),
    weighted (1,K), total (1,1)) all float32.
    """
    need_ce = "cross_entropy" in loss_names
    need_clu = "cluster" in loss_names
    need_sep = "separation" in loss_names
    need_sim = need_clu or need_sep
    need_l1 = "l1" in loss_names
    need_target = need_ce or need_sim
    K = len(loss_names)
    coefs = [float(c) for c in coefficients]

    B = None
    C = P = Cw = Pw = 0
    logits_dt = sims_dt = "float32"
    w_dt = "float32"
    if need_ce:
        (B, C), logits_dt = arg_info["prediction_logits"]
    if need_sim:
        (B, P), sims_dt = arg_info["similarity_score_to_each_prototype"]
    if need_l1:
        (Cw, Pw), w_dt = arg_info["last_layer_weights"]
    if B is None:
        B = 1  # no batched inputs (pure L1): single grid step
    B = int(B)

    # --- per-row streamed bytes / resident bytes -> tile size, vmem limit ----
    per_row = 0
    if need_ce:
        per_row += C * _dsize(logits_dt) + 4           # logits + ce_acc row
    if need_target:
        per_row += 4                                    # int32 target
    if need_sim:
        per_row += P * _dsize(sims_dt)
        per_row += (4 if need_clu else 0) + (4 if need_sep else 0)
    resident = 0
    if need_sim:
        resident += 2 * P * 4                           # proto->class vector (dbl buf)
    if need_l1:
        resident += 2 * Cw * Pw * _dsize(w_dt)          # resident weights (dbl buf)

    budget, cap = _vmem_budget_and_cap()
    max_tile = 2048 if max_batch_tile is None else max(8, (int(max_batch_tile) // 8) * 8)
    tb = _choose_batch_tile(B, per_row, resident, budget, max_tile=max_tile)
    n_steps = -(-B // tb)
    B_grid = n_steps * tb
    pad = B_grid - B
    ragged = pad > 0
    inv_b = 1.0 / float(B)

    footprint = 2 * tb * per_row + resident + (2 << 20)
    vmem_limit = int(min(cap * 3 // 4, max(footprint * 3 // 2, 24 << 20)))

    # --------------------------- kernel body ---------------------------------
    def kernel(*refs):
        it = iter(refs)
        logits_ref = next(it) if need_ce else None
        target_ref = next(it) if need_target else None
        sims_ref = next(it) if need_sim else None
        proto_ref = next(it) if need_sim else None
        w_ref = next(it) if need_l1 else None
        unw_ref = next(it)
        wt_ref = next(it)
        total_ref = next(it)
        ce_acc = next(it) if need_ce else None
        clu_acc = next(it) if need_clu else None
        sep_acc = next(it) if need_sep else None
        l1_acc = next(it) if need_l1 else None

        step = pl.program_id(0)

        @pl.when(step == 0)
        def _init():
            if need_ce:
                ce_acc[...] = jnp.zeros_like(ce_acc)
            if need_clu:
                clu_acc[...] = jnp.zeros_like(clu_acc)
            if need_sep:
                sep_acc[...] = jnp.zeros_like(sep_acc)
            if need_l1:
                # L1 over the resident weights, done up-front so it overlaps with
                # the remaining batch-stream DMAs instead of the final step.
                aw = jnp.abs(w_ref[...].astype(jnp.float32))
                l1_acc[...] = jnp.sum(
                    jnp.sum(aw, axis=-1, keepdims=True), axis=0, keepdims=True)

        valid = None
        if ragged and (need_ce or need_sim):
            rows = lax.broadcasted_iota(jnp.int32, (tb, 1), 0) + step * tb
            valid = rows < B

        if need_ce:
            logits = logits_ref[...].astype(jnp.float32)
            m = jnp.max(logits, axis=-1, keepdims=True)
            shifted = logits - m
            lse = jnp.log(jnp.sum(jnp.exp(shifted), axis=-1, keepdims=True))
            cls_iota = lax.broadcasted_iota(jnp.int32, logits.shape, 1)
            tgt = jnp.sum(jnp.where(cls_iota == target_ref[...], shifted, 0.0),
                          axis=-1, keepdims=True)                      # (tb, 1)
            ce_row = lse - tgt
            if valid is not None:
                ce_row = jnp.where(valid, ce_row, 0.0)
            ce_acc[...] += ce_row                                      # per-row accum

        if need_sim:
            sims = sims_ref[...].astype(jnp.float32)
            own = proto_ref[...] == target_ref[...]                    # (1,P)==(tb,1)
            neg = jnp.float32(-1e30)
            if need_clu:
                own_max = jnp.max(jnp.where(own, sims, neg), axis=-1, keepdims=True)
                if valid is not None:
                    own_max = jnp.where(valid, own_max, 0.0)
                clu_acc[...] += own_max
            if need_sep:
                oth_max = jnp.max(jnp.where(own, neg, sims), axis=-1, keepdims=True)
                if valid is not None:
                    oth_max = jnp.where(valid, oth_max, 0.0)
                sep_acc[...] += oth_max

        @pl.when(step == pl.num_programs(0) - 1)
        def _finalize():
            terms = {}
            if need_ce:
                terms["cross_entropy"] = (
                    jnp.sum(ce_acc[...], axis=0, keepdims=True) * inv_b)
            if need_clu:
                terms["cluster"] = -(
                    jnp.sum(clu_acc[...], axis=0, keepdims=True) * inv_b)
            if need_sep:
                terms["separation"] = (
                    jnp.sum(sep_acc[...], axis=0, keepdims=True) * inv_b)
            if need_l1:
                terms["l1"] = l1_acc[...]

            total = jnp.zeros((1, 1), jnp.float32)
            for k, (name, c) in enumerate(zip(loss_names, coefs)):
                t = terms[name]                       # (1, 1)
                w = t * jnp.float32(c)
                unw_ref[0:1, k:k + 1] = t
                wt_ref[0:1, k:k + 1] = w
                total = total + w
            total_ref[...] = total

    # --------------------------- specs ---------------------------------------
    in_specs = []
    if need_ce:
        in_specs.append(pl.BlockSpec((tb, C), lambda i: (i, 0)))
    if need_target:
        in_specs.append(pl.BlockSpec((tb, 1), lambda i: (i, 0)))
    if need_sim:
        in_specs.append(pl.BlockSpec((tb, P), lambda i: (i, 0)))
        in_specs.append(pl.BlockSpec((1, P), lambda i: (0, 0)))       # resident
    if need_l1:
        in_specs.append(pl.BlockSpec((Cw, Pw), lambda i: (0, 0)))     # resident

    out_specs = (
        pl.BlockSpec((1, K), lambda i: (0, 0)),
        pl.BlockSpec((1, K), lambda i: (0, 0)),
        pl.BlockSpec((1, 1), lambda i: (0, 0)),
    )
    out_shape = (
        jax.ShapeDtypeStruct((1, K), jnp.float32),
        jax.ShapeDtypeStruct((1, K), jnp.float32),
        jax.ShapeDtypeStruct((1, 1), jnp.float32),
    )
    scratch_shapes = []
    if need_ce:
        scratch_shapes.append(pltpu.VMEM((tb, 1), jnp.float32))
    if need_clu:
        scratch_shapes.append(pltpu.VMEM((tb, 1), jnp.float32))
    if need_sep:
        scratch_shapes.append(pltpu.VMEM((tb, 1), jnp.float32))
    if need_l1:
        scratch_shapes.append(pltpu.VMEM((1, 1), jnp.float32))

    fused = pl.pallas_call(
        kernel,
        grid=(n_steps,),
        in_specs=in_specs,
        out_specs=out_specs,
        out_shape=out_shape,
        scratch_shapes=scratch_shapes,
        compiler_params=pltpu.CompilerParams(
            dimension_semantics=("arbitrary",),    # batch axis is a reduction
            vmem_limit_bytes=vmem_limit,
        ),
    )

    needed_kwargs = []
    if need_ce:
        needed_kwargs.append("prediction_logits")
    if need_target:
        needed_kwargs.append("target")
    if need_sim:
        needed_kwargs += ["similarity_score_to_each_prototype",
                          "prototype_class_identity"]
    if need_l1:
        needed_kwargs.append("last_layer_weights")

    @jax.jit
    def run(*args):
        it = iter(args)
        call_args = []
        if need_ce:
            logits = jnp.asarray(next(it))
            if pad:
                logits = jnp.pad(logits, ((0, pad), (0, 0)))
            call_args.append(logits)
        if need_target:
            target = jnp.asarray(next(it)).reshape(-1, 1).astype(jnp.int32)
            if pad:
                target = jnp.pad(target, ((0, pad), (0, 0)))
            call_args.append(target)
        if need_sim:
            sims = jnp.asarray(next(it))
            if pad:
                sims = jnp.pad(sims, ((0, pad), (0, 0)))
            call_args.append(sims)
            proto = jnp.asarray(next(it)).reshape(1, -1).astype(jnp.int32)
            call_args.append(proto)
        if need_l1:
            call_args.append(jnp.asarray(next(it)))
        return fused(*call_args)

    return run, needed_kwargs


# ---------------------------------------------------------------------------
# Loss-component objects (mirror protopnet loss-component interface)
# ---------------------------------------------------------------------------

class CrossEntropyLoss:
    name = "cross_entropy"
    required_forward_results = ("prediction_logits", "target")


class ClusterLoss:
    # NOTE: the dense (B,P) prototypes_of_correct_class mask is replaced by the
    # tiny per-prototype class vector; own-class membership is computed in-kernel.
    name = "cluster"
    required_forward_results = (
        "similarity_score_to_each_prototype", "target", "prototype_class_identity")


class SeparationLoss:
    name = "separation"
    required_forward_results = (
        "similarity_score_to_each_prototype", "target", "prototype_class_identity")


class L1Loss:
    name = "l1"
    required_forward_results = ("last_layer_weights",)


@dataclass
class LossComponent:
    loss: object
    coefficient: float


_SUPPORTED = {"cross_entropy", "cluster", "separation", "l1"}


class LinearBatchLoss:
    """JAX/Pallas port of protopnet's LinearBatchLoss forward pass (fused kernel)."""

    def __init__(self, batch_losses=[], max_batch_tile=None):
        self.batch_losses = batch_losses
        self.max_batch_tile = max_batch_tile
        self._fused_cache = {}

    def required_forward_results(self):
        return {
            req
            for lc in self.batch_losses
            for req in lc.loss.required_forward_results
        }

    def forward(self, **kwargs):
        names = [lc.loss.name for lc in self.batch_losses]
        coefs = [float(lc.coefficient) for lc in self.batch_losses]

        if not set(names) <= _SUPPORTED:
            # Fallback: per-component evaluation (unfused) for custom loss objects.
            total = jnp.zeros((), jnp.float32)
            d = {}
            for lc in self.batch_losses:
                args = {r: kwargs[r] for r in lc.loss.required_forward_results}
                u = jnp.asarray(lc.loss(**args), jnp.float32).reshape(())
                w = u * lc.coefficient
                d[lc.loss.name] = float(u)
                d[lc.loss.name + "_weighted"] = float(w)
                d[lc.loss.name + "_coef"] = float(lc.coefficient)
                total = total + w
            return total, d

        need_ce = "cross_entropy" in names
        need_clu = "cluster" in names
        need_sep = "separation" in names
        need_sim = need_clu or need_sep
        need_l1 = "l1" in names

        # Back-compat: derive the per-prototype class vector from the dense mask
        # (one wrapper-side pass) if a caller only provides prototypes_of_correct_class.
        if need_sim and "prototype_class_identity" not in kwargs:
            mask = jnp.asarray(kwargs["prototypes_of_correct_class"])
            tgt = jnp.asarray(kwargs["target"]).reshape(-1).astype(jnp.int32)
            has = jnp.any(mask > 0.5, axis=0)
            idx = jnp.argmax(mask, axis=0)
            kwargs["prototype_class_identity"] = jnp.where(
                has, tgt[idx], jnp.int32(-1)).astype(jnp.int32)

        needed = []
        if need_ce:
            needed.append("prediction_logits")
        if need_ce or need_sim:
            needed.append("target")
        if need_sim:
            needed += ["similarity_score_to_each_prototype", "prototype_class_identity"]
        if need_l1:
            needed.append("last_layer_weights")

        arg_info = {
            k: (tuple(jnp.asarray(kwargs[k]).shape), str(jnp.asarray(kwargs[k]).dtype))
            for k in needed
        }
        key = (tuple(names), tuple(coefs), tuple(sorted(arg_info.items())),
               self.max_batch_tile)
        if key not in self._fused_cache:
            self._fused_cache[key] = _build_fused_loss(
                names, coefs, arg_info, max_batch_tile=self.max_batch_tile)
        run, needed = self._fused_cache[key]

        unw, wt, total = run(*[kwargs[k] for k in needed])

        # Single batched device->host transfer for the loss-term dict.
        unw_np, wt_np = jax.device_get((unw, wt))
        loss_term_dict = {}
        for k, (name, c) in enumerate(zip(names, coefs)):
            loss_term_dict[name] = float(unw_np[0, k])
            loss_term_dict[name + "_weighted"] = float(wt_np[0, k])
            loss_term_dict[name + "_coef"] = c
        return total.reshape(()), loss_term_dict

    def __repr__(self):
        return f"LinearBatchLoss(batch_losses={self.batch_losses})"


# ---------------------------------------------------------------------------
# Demo
# ---------------------------------------------------------------------------

if __name__ == "__main__":
    import numpy as np

    def run_check(B, C, P, max_batch_tile=None, use_mask=False, seed=0):
        key = jax.random.PRNGKey(seed)
        k1, k2, k3 = jax.random.split(key, 3)
        logits = jax.random.normal(k1, (B, C), jnp.float32)
        target = jax.random.randint(k2, (B,), 0, C, dtype=jnp.int32)
        sims = jax.random.normal(k3, (B, P), jnp.float32)
        proto_class = (jnp.arange(P, dtype=jnp.int32) % C)
        weights = jnp.linspace(-1.0, 1.0, C * P, dtype=jnp.float32).reshape(C, P)

        lbl = LinearBatchLoss(
            batch_losses=[
                LossComponent(CrossEntropyLoss(), 1.0),
                LossComponent(ClusterLoss(), 0.8),
                LossComponent(SeparationLoss(), -0.08),
                LossComponent(L1Loss(), 1e-4),
            ],
            max_batch_tile=max_batch_tile,
        )

        fwd_kwargs = dict(
            prediction_logits=logits,
            target=target,
            similarity_score_to_each_prototype=sims,
            last_layer_weights=weights,
        )
        if use_mask:
            fwd_kwargs["prototypes_of_correct_class"] = (
                proto_class[None, :] == target[:, None]).astype(jnp.float32)
        else:
            fwd_kwargs["prototype_class_identity"] = proto_class

        total_loss, terms = lbl.forward(**fwd_kwargs)
        jax.block_until_ready(total_loss)

        # Pure-JAX reference check.
        logp = jax.nn.log_softmax(logits, axis=-1)
        ce_ref = -jnp.mean(logp[jnp.arange(B), target])
        own = proto_class[None, :] == target[:, None]
        clu_ref = -jnp.mean(jnp.max(jnp.where(own, sims, -1e30), axis=-1))
        sep_ref = jnp.mean(jnp.max(jnp.where(own, -1e30, sims), axis=-1))
        l1_ref = jnp.sum(jnp.abs(weights))
        total_ref = 1.0 * ce_ref + 0.8 * clu_ref + (-0.08) * sep_ref + 1e-4 * l1_ref

        np.testing.assert_allclose(terms["cross_entropy"], float(ce_ref), rtol=1e-4, atol=1e-5)
        np.testing.assert_allclose(terms["cluster"], float(clu_ref), rtol=1e-4, atol=1e-5)
        np.testing.assert_allclose(terms["separation"], float(sep_ref), rtol=1e-4, atol=1e-5)
        np.testing.assert_allclose(terms["l1"], float(l1_ref), rtol=1e-4, atol=1e-5)
        np.testing.assert_allclose(float(total_loss), float(total_ref), rtol=1e-4, atol=1e-5)

    # 1) Small aligned batch, single grid step, lean prototype-class-vector path.
    run_check(B=8, C=10, P=12)
    # 2) Ragged batch + forced small tile: pads 20 -> 24, 3 grid steps (accumulator path).
    run_check(B=20, C=10, P=12, max_batch_tile=8)
    # 3) Back-compat path: caller provides the dense mask; wrapper derives the vector.
    run_check(B=8, C=10, P=12, use_mask=True)

    print("KERNEL_OK")
</pallas_src>

<mosaic_0001>
module attributes {stable_mosaic.version = 11 : i64} {
  func.func @kernel(%arg0: i32, %arg1: memref<8x10xf32, #tpu.memory_space<vmem>>, %arg2: memref<8x1xi32, #tpu.memory_space<vmem>>, %arg3: memref<8x12xf32, #tpu.memory_space<vmem>>, %arg4: memref<1x12xi32, #tpu.memory_space<vmem>>, %arg5: memref<10x12xf32, #tpu.memory_space<vmem>>, %arg6: memref<1x4xf32, #tpu.memory_space<vmem>>, %arg7: memref<1x4xf32, #tpu.memory_space<vmem>>, %arg8: memref<1x1xf32, #tpu.memory_space<vmem>>, %arg9: memref<8x1xf32, #tpu.memory_space<vmem>>, %arg10: memref<8x1xf32, #tpu.memory_space<vmem>>, %arg11: memref<8x1xf32, #tpu.memory_space<vmem>>, %arg12: memref<1x1xf32, #tpu.memory_space<vmem>>) attributes {dimension_semantics = [#tpu.dimension_semantics<arbitrary>], iteration_bounds = array<i64: 1>, scalar_prefetch = 0 : i64, scratch_operands = 4 : i64, tpu.core_type = #tpu.core_type<tc>, window_params = [{transform_indices = @transform_0, window_bounds = array<i64: 8, 10>}, {transform_indices = @transform_1, window_bounds = array<i64: 8, 1>}, {transform_indices = @transform_2, window_bounds = array<i64: 8, 12>}, {pipeline_mode = #tpu.pipeline_mode<synchronous>, transform_indices = @transform_3, window_bounds = array<i64: 1, 12>}, {pipeline_mode = #tpu.pipeline_mode<synchronous>, transform_indices = @transform_4, window_bounds = array<i64: 10, 12>}, {pipeline_mode = #tpu.pipeline_mode<synchronous>, transform_indices = @transform_5, window_bounds = array<i64: 1, 4>}, {pipeline_mode = #tpu.pipeline_mode<synchronous>, transform_indices = @transform_6, window_bounds = array<i64: 1, 4>}, {pipeline_mode = #tpu.pipeline_mode<synchronous>, transform_indices = @transform_7, window_bounds = array<i64: 1, 1>}]} {
    %c0_i32 = arith.constant 0 : i32
    %0 = arith.cmpi eq, %arg0, %c0_i32 : i32
    %1 = arith.extui %0 : i1 to i32
    %c0_i32_0 = arith.constant 0 : i32
    %2 = arith.cmpi ne, %1, %c0_i32_0 : i32
    scf.if %2 {
      %cst_31 = arith.constant 0.000000e+00 : f32
      %47 = vector.broadcast %cst_31 : f32 to vector<8x1xf32>
      %c0_32 = arith.constant 0 : index
      %c0_33 = arith.constant 0 : index
      %48 = vector.load %arg9[%c0_32, %c0_33] : memref<8x1xf32, #tpu.memory_space<vmem>>, vector<8x1xf32>
      tpu.vector_store %arg9[%c0_32, %c0_33], %47 {strides = array<i32>} : memref<8x1xf32, #tpu.memory_space<vmem>>, vector<8x1xf32>,
      %cst_34 = arith.constant 0.000000e+00 : f32
      %49 = vector.broadcast %cst_34 : f32 to vector<8x1xf32>
      %c0_35 = arith.constant 0 : index
      %c0_36 = arith.constant 0 : index
      %50 = vector.load %arg10[%c0_35, %c0_36] : memref<8x1xf32, #tpu.memory_space<vmem>>, vector<8x1xf32>
      tpu.vector_store %arg10[%c0_35, %c0_36], %49 {strides = array<i32>} : memref<8x1xf32, #tpu.memory_space<vmem>>, vector<8x1xf32>,
      %cst_37 = arith.constant 0.000000e+00 : f32
      %51 = vector.broadcast %cst_37 : f32 to vector<8x1xf32>
      %c0_38 = arith.constant 0 : index
      %c0_39 = arith.constant 0 : index
      %52 = vector.load %arg11[%c0_38, %c0_39] : memref<8x1xf32, #tpu.memory_space<vmem>>, vector<8x1xf32>
      tpu.vector_store %arg11[%c0_38, %c0_39], %51 {strides = array<i32>} : memref<8x1xf32, #tpu.memory_space<vmem>>, vector<8x1xf32>,
      %c0_40 = arith.constant 0 : index
      %c0_41 = arith.constant 0 : index
      %53 = vector.load %arg5[%c0_40, %c0_41] : memref<10x12xf32, #tpu.memory_space<vmem>>, vector<10x12xf32>
      %54 = math.absf %53 : vector<10x12xf32>
      %cst_42 = arith.constant dense<0.000000e+00> : vector<10xf32>
      %55 = vector.multi_reduction <add>, %54, %cst_42 [1] : vector<10x12xf32> to vector<10xf32>
      %56 = vector.shape_cast %55 : vector<10xf32> to vector<10x1xf32>
      %cst_43 = arith.constant dense<0.000000e+00> : vector<1xf32>
      %57 = vector.multi_reduction <add>, %56, %cst_43 [0] : vector<10x1xf32> to vector<1xf32>
      %58 = vector.shape_cast %57 : vector<1xf32> to vector<1x1xf32>
      %c0_44 = arith.constant 0 : index
      %c0_45 = arith.constant 0 : index
      %59 = vector.load %arg12[%c0_44, %c0_45] : memref<1x1xf32, #tpu.memory_space<vmem>>, vector<1x1xf32>
      tpu.vector_store %arg12[%c0_44, %c0_45], %58 {strides = array<i32>} : memref<1x1xf32, #tpu.memory_space<vmem>>, vector<1x1xf32>,
    } else {
    }
    %c0 = arith.constant 0 : index
    %c0_1 = arith.constant 0 : index
    %3 = vector.load %arg1[%c0, %c0_1] : memref<8x10xf32, #tpu.memory_space<vmem>>, vector<8x10xf32>
    %cst = arith.constant dense<0xFF800000> : vector<8xf32>
    %4 = vector.multi_reduction <maximumf>, %3, %cst [1] : vector<8x10xf32> to vector<8xf32>
    %5 = vector.shape_cast %4 : vector<8xf32> to vector<8x1xf32>
    %6 = vector.broadcast %5 : vector<8x1xf32> to vector<8x10xf32>
    %7 = arith.subf %3, %6 : vector<8x10xf32>
    %8 = math.exp %7 : vector<8x10xf32>
    %cst_2 = arith.constant dense<0.000000e+00> : vector<8xf32>
    %9 = vector.multi_reduction <add>, %8, %cst_2 [1] : vector<8x10xf32> to vector<8xf32>
    %10 = vector.shape_cast %9 : vector<8xf32> to vector<8x1xf32>
    %11 = math.log %10 : vector<8x1xf32>
    %12 = tpu.iota {dimensions = array<i32: 1>} : vector<8x10xi32>
    %c0_3 = arith.constant 0 : index
    %c0_4 = arith.constant 0 : index
    %13 = vector.load %arg2[%c0_3, %c0_4] : memref<8x1xi32, #tpu.memory_space<vmem>>, vector<8x1xi32>
    %14 = vector.broadcast %13 : vector<8x1xi32> to vector<8x10xi32>
    %15 = arith.cmpi eq, %12, %14 : vector<8x10xi32>
    %cst_5 = arith.constant 0.000000e+00 : f32
    %16 = vector.broadcast %cst_5 : f32 to vector<8x10xf32>
    %17 = arith.select %15, %7, %16 : vector<8x10xi1>, vector<8x10xf32>
    %cst_6 = arith.constant dense<0.000000e+00> : vector<8xf32>
    %18 = vector.multi_reduction <add>, %17, %cst_6 [1] : vector<8x10xf32> to vector<8xf32>
    %19 = vector.shape_cast %18 : vector<8xf32> to vector<8x1xf32>
    %20 = arith.subf %11, %19 : vector<8x1xf32>
    %c0_7 = arith.constant 0 : index
    %c0_8 = arith.constant 0 : index
    %21 = vector.load %arg9[%c0_7, %c0_8] : memref<8x1xf32, #tpu.memory_space<vmem>>, vector<8x1xf32>
    %22 = arith.addf %21, %20 : vector<8x1xf32>
    %c0_9 = arith.constant 0 : index
    %c0_10 = arith.constant 0 : index
    %23 = vector.load %arg9[%c0_9, %c0_10] : memref<8x1xf32, #tpu.memory_space<vmem>>, vector<8x1xf32>
    tpu.vector_store %arg9[%c0_9, %c0_10], %22 {strides = array<i32>} : memref<8x1xf32, #tpu.memory_space<vmem>>, vector<8x1xf32>,
    %c0_11 = arith.constant 0 : index
    %c0_12 = arith.constant 0 : index
    %24 = vector.load %arg3[%c0_11, %c0_12] : memref<8x12xf32, #tpu.memory_space<vmem>>, vector<8x12xf32>
    %c0_13 = arith.constant 0 : index
    %c0_14 = arith.constant 0 : index
    %25 = vector.load %arg4[%c0_13, %c0_14] : memref<1x12xi32, #tpu.memory_space<vmem>>, vector<1x12xi32>
    %c0_15 = arith.constant 0 : index
    %c0_16 = arith.constant 0 : index
    %26 = vector.load %arg2[%c0_15, %c0_16] : memref<8x1xi32, #tpu.memory_space<vmem>>, vector<8x1xi32>
    %27 = vector.broadcast %25 : vector<1x12xi32> to vector<8x12xi32>
    %28 = vector.broadcast %26 : vector<8x1xi32> to vector<8x12xi32>
    %29 = arith.cmpi eq, %27, %28 : vector<8x12xi32>
    %cst_17 = arith.constant -1.000000e+30 : f32
    %30 = vector.broadcast %cst_17 : f32 to vector<8x12xf32>
    %31 = arith.select %29, %24, %30 : vector<8x12xi1>, vector<8x12xf32>
    %cst_18 = arith.constant dense<0xFF800000> : vector<8xf32>
    %32 = vector.multi_reduction <maximumf>, %31, %cst_18 [1] : vector<8x12xf32> to vector<8xf32>
    %33 = vector.shape_cast %32 : vector<8xf32> to vector<8x1xf32>
    %c0_19 = arith.constant 0 : index
    %c0_20 = arith.constant 0 : index
    %34 = vector.load %arg10[%c0_19, %c0_20] : memref<8x1xf32, #tpu.memory_space<vmem>>, vector<8x1xf32>
    %35 = arith.addf %34, %33 : vector<8x1xf32>
    %c0_21 = arith.constant 0 : index
    %c0_22 = arith.constant 0 : index
    %36 = vector.load %arg10[%c0_21, %c0_22] : memref<8x1xf32, #tpu.memory_space<vmem>>, vector<8x1xf32>
    tpu.vector_store %arg10[%c0_21, %c0_22], %35 {strides = array<i32>} : memref<8x1xf32, #tpu.memory_space<vmem>>, vector<8x1xf32>,
    %cst_23 = arith.constant -1.000000e+30 : f32
    %37 = vector.broadcast %cst_23 : f32 to vector<8x12xf32>
    %38 = arith.select %29, %37, %24 : vector<8x12xi1>, vector<8x12xf32>
    %cst_24 = arith.constant dense<0xFF800000> : vector<8xf32>
    %39 = vector.multi_reduction <maximumf>, %38, %cst_24 [1] : vector<8x12xf32> to vector<8xf32>
    %40 = vector.shape_cast %39 : vector<8xf32> to vector<8x1xf32>
    %c0_25 = arith.constant 0 : index
    %c0_26 = arith.constant 0 : index
    %41 = vector.load %arg11[%c0_25, %c0_26] : memref<8x1xf32, #tpu.memory_space<vmem>>, vector<8x1xf32>
    %42 = arith.addf %41, %40 : vector<8x1xf32>
    %c0_27 = arith.constant 0 : index
    %c0_28 = arith.constant 0 : index
    %43 = vector.load %arg11[%c0_27, %c0_28] : memref<8x1xf32, #tpu.memory_space<vmem>>, vector<8x1xf32>
    tpu.vector_store %arg11[%c0_27, %c0_28], %42 {strides = array<i32>} : memref<8x1xf32, #tpu.memory_space<vmem>>, vector<8x1xf32>,
    %c0_i32_29 = arith.constant 0 : i32
    %44 = arith.cmpi eq, %arg0, %c0_i32_29 : i32
    %45 = arith.extui %44 : i1 to i32
    %c0_i32_30 = arith.constant 0 : i32
    %46 = arith.cmpi ne, %45, %c0_i32_30 : i32
    scf.if %46 {
      %c0_31 = arith.constant 0 : index
      %c0_32 = arith.constant 0 : index
      %47 = vector.load %arg9[%c0_31, %c0_32] : memref<8x1xf32, #tpu.memory_space<vmem>>, vector<8x1xf32>
      %cst_33 = arith.constant dense<0.000000e+00> : vector<1xf32>
      %48 = vector.multi_reduction <add>, %47, %cst_33 [0] : vector<8x1xf32> to vector<1xf32>
      %49 = vector.shape_cast %48 : vector<1xf32> to vector<1x1xf32>
      %cst_34 = arith.constant 1.250000e-01 : f32
      %50 = vector.broadcast %cst_34 : f32 to vector<1x1xf32>
      %51 = arith.mulf %49, %50 : vector<1x1xf32>
      %c0_35 = arith.constant 0 : index
      %c0_36 = arith.constant 0 : index
      %52 = vector.load %arg10[%c0_35, %c0_36] : memref<8x1xf32, #tpu.memory_space<vmem>>, vector<8x1xf32>
      %cst_37 = arith.constant dense<0.000000e+00> : vector<1xf32>
      %53 = vector.multi_reduction <add>, %52, %cst_37 [0] : vector<8x1xf32> to vector<1xf32>
      %54 = vector.shape_cast %53 : vector<1xf32> to vector<1x1xf32>
      %cst_38 = arith.constant 1.250000e-01 : f32
      %55 = vector.broadcast %cst_38 : f32 to vector<1x1xf32>
      %56 = arith.mulf %54, %55 : vector<1x1xf32>
      %cst_39 = arith.constant 0.000000e+00 : f32
      %57 = vector.broadcast %cst_39 : f32 to vector<1x1xf32>
      %58 = arith.subf %57, %56 : vector<1x1xf32>
      %c0_40 = arith.constant 0 : index
      %c0_41 = arith.constant 0 : index
      %59 = vector.load %arg11[%c0_40, %c0_41] : memref<8x1xf32, #tpu.memory_space<vmem>>, vector<8x1xf32>
      %cst_42 = arith.constant dense<0.000000e+00> : vector<1xf32>
      %60 = vector.multi_reduction <add>, %59, %cst_42 [0] : vector<8x1xf32> to vector<1xf32>
      %61 = vector.shape_cast %60 : vector<1xf32> to vector<1x1xf32>
      %cst_43 = arith.constant 1.250000e-01 : f32
      %62 = vector.broadcast %cst_43 : f32 to vector<1x1xf32>
      %63 = arith.mulf %61, %62 : vector<1x1xf32>
      %c0_44 = arith.constant 0 : index
      %c0_45 = arith.constant 0 : index
      %64 = vector.load %arg12[%c0_44, %c0_45] : memref<1x1xf32, #tpu.memory_space<vmem>>, vector<1x1xf32>
      %cst_46 = arith.constant 0.000000e+00 : f32
      %65 = vector.broadcast %cst_46 : f32 to vector<1x1xf32>
      %cst_47 = arith.constant 1.000000e+00 : f32
      %66 = vector.broadcast %cst_47 : f32 to vector<1x1xf32>
      %67 = arith.mulf %51, %66 : vector<1x1xf32>
      %c0_48 = arith.constant 0 : index
      %c0_49 = arith.constant 0 : index
      %68 = vector.load %arg6[%c0_48, %c0_49] : memref<1x4xf32, #tpu.memory_space<vmem>>, vector<1x1xf32>
      tpu.vector_store %arg6[%c0_48, %c0_49], %51 {strides = array<i32>} : memref<1x4xf32, #tpu.memory_space<vmem>>, vector<1x1xf32>,
      %c0_50 = arith.constant 0 : index
      %c0_51 = arith.constant 0 : index
      %69 = vector.load %arg7[%c0_50, %c0_51] : memref<1x4xf32, #tpu.memory_space<vmem>>, vector<1x1xf32>
      tpu.vector_store %arg7[%c0_50, %c0_51], %67 {strides = array<i32>} : memref<1x4xf32, #tpu.memory_space<vmem>>, vector<1x1xf32>,
      %70 = arith.addf %65, %67 : vector<1x1xf32>
      %cst_52 = arith.constant 8.000000e-01 : f32
      %71 = vector.broadcast %cst_52 : f32 to vector<1x1xf32>
      %72 = arith.mulf %58, %71 : vector<1x1xf32>
      %c0_53 = arith.constant 0 : index
      %c1 = arith.constant 1 : index
      %73 = vector.load %arg6[%c0_53, %c1] : memref<1x4xf32, #tpu.memory_space<vmem>>, vector<1x1xf32>
      tpu.vector_store %arg6[%c0_53, %c1], %58 {strides = array<i32>} : memref<1x4xf32, #tpu.memory_space<vmem>>, vector<1x1xf32>,
      %c0_54 = arith.constant 0 : index
      %c1_55 = arith.constant 1 : index
      %74 = vector.load %arg7[%c0_54, %c1_55] : memref<1x4xf32, #tpu.memory_space<vmem>>, vector<1x1xf32>
      tpu.vector_store %arg7[%c0_54, %c1_55], %72 {strides = array<i32>} : memref<1x4xf32, #tpu.memory_space<vmem>>, vector<1x1xf32>,
      %75 = arith.addf %70, %72 : vector<1x1xf32>
      %cst_56 = arith.constant -8.000000e-02 : f32
      %76 = vector.broadcast %cst_56 : f32 to vector<1x1xf32>
      %77 = arith.mulf %63, %76 : vector<1x1xf32>
      %c0_57 = arith.constant 0 : index
      %c2 = arith.constant 2 : index
      %78 = vector.load %arg6[%c0_57, %c2] : memref<1x4xf32, #tpu.memory_space<vmem>>, vector<1x1xf32>
      tpu.vector_store %arg6[%c0_57, %c2], %63 {strides = array<i32>} : memref<1x4xf32, #tpu.memory_space<vmem>>, vector<1x1xf32>,
      %c0_58 = arith.constant 0 : index
      %c2_59 = arith.constant 2 : index
      %79 = vector.load %arg7[%c0_58, %c2_59] : memref<1x4xf32, #tpu.memory_space<vmem>>, vector<1x1xf32>
      tpu.vector_store %arg7[%c0_58, %c2_59], %77 {strides = array<i32>} : memref<1x4xf32, #tpu.memory_space<vmem>>, vector<1x1xf32>,
      %80 = arith.addf %75, %77 : vector<1x1xf32>
      %cst_60 = arith.constant 9.99999974E-5 : f32
      %81 = vector.broadcast %cst_60 : f32 to vector<1x1xf32>
      %82 = arith.mulf %64, %81 : vector<1x1xf32>
      %c0_61 = arith.constant 0 : index
      %c3 = arith.constant 3 : index
      %83 = vector.load %arg6[%c0_61, %c3] : memref<1x4xf32, #tpu.memory_space<vmem>>, vector<1x1xf32>
      tpu.vector_store %arg6[%c0_61, %c3], %64 {strides = array<i32>} : memref<1x4xf32, #tpu.memory_space<vmem>>, vector<1x1xf32>,
      %c0_62 = arith.constant 0 : index
      %c3_63 = arith.constant 3 : index
      %84 = vector.load %arg7[%c0_62, %c3_63] : memref<1x4xf32, #tpu.memory_space<vmem>>, vector<1x1xf32>
      tpu.vector_store %arg7[%c0_62, %c3_63], %82 {strides = array<i32>} : memref<1x4xf32, #tpu.memory_space<vmem>>, vector<1x1xf32>,
      %85 = arith.addf %80, %82 : vector<1x1xf32>
      %c0_64 = arith.constant 0 : index
      %c0_65 = arith.constant 0 : index
      %86 = vector.load %arg8[%c0_64, %c0_65] : memref<1x1xf32, #tpu.memory_space<vmem>>, vector<1x1xf32>
      tpu.vector_store %arg8[%c0_64, %c0_65], %85 {strides = array<i32>} : memref<1x1xf32, #tpu.memory_space<vmem>>, vector<1x1xf32>,
    } else {
    }
    return
  }
  func.func @transform_0(%arg0: i32) -> (i32, i32) {
    %c0_i32 = arith.constant 0 : i32
    %c0_i32_0 = arith.constant 0 : i32
    return %arg0, %c0_i32 : i32, i32
  }
  func.func @transform_1(%arg0: i32) -> (i32, i32) {
    %c0_i32 = arith.constant 0 : i32
    %c0_i32_0 = arith.constant 0 : i32
    return %arg0, %c0_i32 : i32, i32
  }
  func.func @transform_2(%arg0: i32) -> (i32, i32) {
    %c0_i32 = arith.constant 0 : i32
    %c0_i32_0 = arith.constant 0 : i32
    return %arg0, %c0_i32 : i32, i32
  }
  func.func @transform_3(%arg0: i32) -> (i32, i32) {
    %c0_i32 = arith.constant 0 : i32
    %c0_i32_0 = arith.constant 0 : i32
    %c0_i32_1 = arith.constant 0 : i32
    return %c0_i32, %c0_i32_0 : i32, i32
  }
  func.func @transform_4(%arg0: i32) -> (i32, i32) {
    %c0_i32 = arith.constant 0 : i32
    %c0_i32_0 = arith.constant 0 : i32
    %c0_i32_1 = arith.constant 0 : i32
    return %c0_i32, %c0_i32_0 : i32, i32
  }
  func.func @transform_5(%arg0: i32) -> (i32, i32) {
    %c0_i32 = arith.constant 0 : i32
    %c0_i32_0 = arith.constant 0 : i32
    %c0_i32_1 = arith.constant 0 : i32
    return %c0_i32, %c0_i32_0 : i32, i32
  }
  func.func @transform_6(%arg0: i32) -> (i32, i32) {
    %c0_i32 = arith.constant 0 : i32
    %c0_i32_0 = arith.constant 0 : i32
    %c0_i32_1 = arith.constant 0 : i32
    return %c0_i32, %c0_i32_0 : i32, i32
  }
  func.func @transform_7(%arg0: i32) -> (i32, i32) {
    %c0_i32 = arith.constant 0 : i32
    %c0_i32_0 = arith.constant 0 : i32
    %c0_i32_1 = arith.constant 0 : i32
    return %c0_i32, %c0_i32_0 : i32, i32
  }
}

</mosaic_0001>

<llo_original>
// kernel: run.1
$region0: #{run.1}
  #allocation0 [shape = 'u32[]', space=smem, size = 0x4, offset = 0x4, fixed_abs, tag = 'smem constant byte address 0x4 - core index']
  #allocation1 [shape = 'u32[144,128]{1,0:T(1,128)}', space=vmem, size = 0x12000, scoped, tag = 'internal scratch']
  #allocation2 [shape = 'f32[8,1]{1,0:T(8,128)}', space=vmem, size = 0x1000, scoped, tag = 'scratch operand']
  #allocation3 [shape = 'f32[8,1]{1,0:T(8,128)}', space=vmem, size = 0x1000, scoped, tag = 'scratch operand']
  #allocation4 [shape = 'f32[8,1]{1,0:T(8,128)}', space=vmem, size = 0x1000, scoped, tag = 'scratch operand']
  #allocation5 [shape = 'f32[1,1]{1,0:T(1,128)}', space=vmem, size = 0x200, scoped, tag = 'scratch operand']
  %s0 = inlined_call_operand.hbm [shape: f32[8,10], index: 0, kind: input, shape index: {}]
  %s1 = inlined_call_operand.vmem [shape: s32[8,1], index: 1, kind: input, shape index: {}]
  %s2 = inlined_call_operand.hbm [shape: f32[8,12], index: 2, kind: input, shape index: {}]
  %s3 = inlined_call_operand.vmem [shape: s32[1,12], index: 3, kind: input, shape index: {}]
  %s4 = inlined_call_operand.vmem [shape: f32[10,12], index: 4, kind: input, shape index: {}]
  %s5 = inlined_call_operand.hbm [shape: f32[1,4], index: 5, kind: output, shape index: {0}]
  %s6 = inlined_call_operand.hbm [shape: f32[1,4], index: 6, kind: output, shape index: {1}]
  %s7 = inlined_call_operand.hbm [shape: f32[1,1], index: 7, kind: output, shape index: {2}]
  %8 = xla_tuple %s5, %s6, %s7
  %s9 = sld [smem:[#allocation0]]
  $region62: #{run.1} parent=0
    _
  %s11 = ssub.s32 1, %s9
  %s12 = scalar_select 0, %s11, %s9
  $region1: #{run.1} parent=0
    #allocation6 [shape = 'u8[4096]{0}', space=vmem, size = 0x1000, scoped, tag = 'input window, operand 0, single buffered']
    #allocation7 [shape = 's32[1]{0}', space=sflag, size = 0x4, scoped, tag = 'scoped memory for run.1']
    #allocation8 [shape = 's32[1]{0}', space=sflag, size = 0x4, scoped, tag = 'scoped memory for run.1']
    #allocation9 [shape = 'u8[4096]{0}', space=vmem, size = 0x1000, scoped, tag = 'input window, operand 2, single buffered']
    #allocation10 [shape = 's32[1]{0}', space=sflag, size = 0x4, scoped, tag = 'scoped memory for run.1']
    #allocation11 [shape = 'u8[512]{0}', space=vmem, size = 0x400, scoped, tag = 'output window, operand 0, single buffered']
    #allocation12 [shape = 'u8[512]{0}', space=vmem, size = 0x400, scoped, tag = 'output window, operand 1, single buffered']
    #allocation13 [shape = 's32[1]{0}', space=sflag, size = 0x4, scoped, tag = 'scoped memory for run.1']
    #allocation14 [shape = 'u8[512]{0}', space=vmem, size = 0x400, scoped, tag = 'output window, operand 2, single buffered']
    %13 = vsyncpa [#allocation7], 0
    %14 = vsyncpa [#allocation10], 0
    %15 = vsyncpa [#allocation8], 0
    %16 = vsyncpa [#allocation13], 0
    // Predicated region
    $region2: #{run.1} parent=1 // pred_check
      _
    $region3: #{run.1} parent=1 // pred_check_branch
      %18 = sbr.rel (0) target = $region5
    $region4: #{run.1} parent=1 // pred_region
      %s20 = ssub.s32 128, 128
      %21 = vsyncadd [#allocation7], %s20
      %s23 = sshll.u32 [#allocation6], 4
      %s24 = int_to_ptr.vmem [resolvable:$true] %s23
      %26 = dma.hbm_to_vmem [thread:$0]  %s0, 128, %s24, [#allocation7]
    $region5: #{run.1} parent=1 // pred_fallthru
      _
    // Predicated region
    $region6: #{run.1} parent=1 // pred_check
      _
    $region7: #{run.1} parent=1 // pred_check_branch
      %28 = sbr.rel (0) target = $region9
    $region8: #{run.1} parent=1 // pred_region
      _
    $region9: #{run.1} parent=1 // pred_fallthru
      _
    // Predicated region
    $region10: #{run.1} parent=1 // pred_check
      _
    $region11: #{run.1} parent=1 // pred_check_branch
      %30 = sbr.rel (0) target = $region13
    $region12: #{run.1} parent=1 // pred_region
      %s32 = ssub.s32 128, 128
      %33 = vsyncadd [#allocation10], %s32
      %s35 = sshll.u32 [#allocation9], 4
      %s36 = int_to_ptr.vmem [resolvable:$true] %s35
      %38 = dma.hbm_to_vmem [thread:$0]  %s2, 128, %s36, [#allocation10]
    $region13: #{run.1} parent=1 // pred_fallthru
      _
    // Predicated region
    $region14: #{run.1} parent=1 // pred_check
      _
    $region15: #{run.1} parent=1 // pred_check_branch
      %40 = sbr.rel (0) target = $region17
    $region16: #{run.1} parent=1 // pred_region
      _
    $region17: #{run.1} parent=1 // pred_fallthru
      _
    // Predicated region
    $region18: #{run.1} parent=1 // pred_check
      _
    $region19: #{run.1} parent=1 // pred_check_branch
      %42 = sbr.rel (0) target = $region21
    $region20: #{run.1} parent=1 // pred_region
      _
    $region21: #{run.1} parent=1 // pred_fallthru
      _
    // Predicated region
    $region22: #{run.1} parent=1 // pred_check
      _
    $region23: #{run.1} parent=1 // pred_check_branch
      %44 = sbr.rel (0) target = $region25
    $region24: #{run.1} parent=1 // pred_region
      %45 = dma.done [#allocation7], 128
    $region25: #{run.1} parent=1 // pred_fallthru
      _
    // Predicated region
    $region26: #{run.1} parent=1 // pred_check
      _
    $region27: #{run.1} parent=1 // pred_check_branch
      %47 = sbr.rel (0) target = $region29
    $region28: #{run.1} parent=1 // pred_region
      %48 = dma.done [#allocation10], 128
    $region29: #{run.1} parent=1 // pred_fallthru
      _
    %p49 = scmp.eq.s32.totalorder 0, 0
    // Predicated region
    $region30: #{run.1} parent=1 // pred_check
      %p50 = pneg %p49
    $region31: #{run.1} parent=1 // pred_check_branch
      %52 = sbr.rel (%p50) target = $region33
    $region32: #{run.1} parent=1 // pred_region
      %vm53 = vcmask 7168
      %54 = vst.msk [vmem:[#allocation2] sm:$0xff] %vm53, 0.0
      %55 = vst.msk [vmem:[#allocation3] sm:$0xff] %vm53, 0.0
      %56 = vst.msk [vmem:[#allocation4] sm:$0xff] %vm53, 0.0
      %v57 = vld [vmem:[%s4] sm:$0xff]
      %v58 = vld [vmem:[%s4 + $0x8] sm:$0x3]
      %v59 = vand.u32 2147483647, %v57
      %v60 = vand.u32 2147483647, %v58
      %vm61 = vcmask 97280
      %v62 = vsel %vm61, %v59, 0.0
      %63 = vadd.xlane.f32.xlu0 %v62
      %v64 = vpop.xlane.xlu0 %63
      %vm65 = vcmask 91136
      %v66 = vsel %vm65, %v60, 0.0
      %67 = vadd.xlane.f32.xlu0 %v66
      %v68 = vpop.xlane.xlu0 %67
      %vm69 = vcmask 1041408
      %v70 = vsel %vm69, %v68, 0.0
      %v71 = vadd.f32 %v64, %v70
      %v72 = vrot.slane %v71, 4
      %v73 = vadd.f32 %v71, %v72
      %v74 = vrot.slane %v73, 2
      %v75 = vadd.f32 %v73, %v74
      %v76 = vrot.slane %v75, 1
      %v77 = vadd.f32 %v75, %v76
      %vm78 = vcmask 0
      %79 = vst.msk [vmem:[#allocation5] sm:$0x1] %vm78, %v77
    $region33: #{run.1} parent=1 // pred_fallthru
      _
    %v80 = vld [vmem:[#allocation6] sm:$0xff]
    %vm81 = vcmask 80896
    %v82 = vsel %vm81, %v80, -inf
    %83 = vmax.xlane.f32.xlu0 %v82
    %v84 = vpop.xlane.xlu0 %83
    %v85 = vsub.f32 %v80, %v84
    %v86 = vmul.f32 %v85, 1.442695
    %v87 = vpow.pop %v86
    %v88 = vsel %vm81, %v87, 0.0
    %89 = vadd.xlane.f32.xlu0 %v88
    %v90 = vpop.xlane.xlu0 %89
    %v91 = vlog2.pop %v90
    %v92 = vmul.f32 %v91, 0.6931472
    %v93 = vlaneseq
    %v94 = vand.u32 %v93, 127
    %v95 = vld [vmem:[%s1] sm:$0xff]
    %96 = vset.pattern.permute.xlu0 0
    %97 = vperm.xlu0 %96, %v95
    %v98 = vpop.permute.xlu0 %97
    %vm99 = vcmp.eq.s32.totalorder %v94, %v98
    %v100 = vsel %vm99, %v85, 0.0
    %v101 = vsel %vm81, %v100, 0.0
    %102 = vadd.xlane.f32.xlu0 %v101
    %v103 = vpop.xlane.xlu0 %102
    %v104 = vsub.f32 %v92, %v103
    %v105 = vld [vmem:[#allocation2] sm:$0xff]
    %v106 = vadd.f32 %v105, %v104
    %vm107 = vcmask 7168
    %108 = vst.msk [vmem:[#allocation2] sm:$0xff] %vm107, %v106
    %v109 = vld [vmem:[#allocation9] sm:$0xff]
    %v110 = vld [vmem:[%s3] sm:$0x1]
    %v111 = vld [vmem:[%s1] sm:$0xff]
    %v112 = vlaneseq
    %v113 = vshrl.u32 %v112, 7
    %v114 = vsub.s32 0, %v113
    %v115 = vrot.slane %v110, %v114
    %116 = vset.pattern.permute.xlu0 0
    %117 = vperm.xlu0 %116, %v111
    %v118 = vpop.permute.xlu0 %117
    %vm119 = vcmp.eq.s32.totalorder %v115, %v118
    %v120 = vsel %vm119, %v109, -1e+30
    %vm121 = vcmask 97280
    %v122 = vsel %vm121, %v120, -inf
    %123 = vmax.xlane.f32.xlu0 %v122
    %v124 = vpop.xlane.xlu0 %123
    %v125 = vld [vmem:[#allocation3] sm:$0xff]
    %v126 = vadd.f32 %v125, %v124
    %127 = vst.msk [vmem:[#allocation3] sm:$0xff] %vm107, %v126
    %v128 = vsel %vm119, -1e+30, %v109
    %v129 = vsel %vm121, %v128, -inf
    %130 = vmax.xlane.f32.xlu0 %v129
    %v131 = vpop.xlane.xlu0 %130
    %v132 = vld [vmem:[#allocation4] sm:$0xff]
    %v133 = vadd.f32 %v132, %v131
    %134 = vst.msk [vmem:[#allocation4] sm:$0xff] %vm107, %v133
    // Predicated region
    $region34: #{run.1} parent=1 // pred_check
      %p135 = pneg %p49
    $region35: #{run.1} parent=1 // pred_check_branch
      %137 = sbr.rel (%p135) target = $region37
    $region36: #{run.1} parent=1 // pred_region
      %v138 = vld [vmem:[#allocation2] sm:$0xff]
      %v139 = vsel %vm107, %v138, 0.0
      %v140 = vrot.slane %v139, 4
      %v141 = vadd.f32 %v139, %v140
      %v142 = vrot.slane %v141, 2
      %v143 = vadd.f32 %v141, %v142
      %v144 = vrot.slane %v143, 1
      %v145 = vadd.f32 %v143, %v144
      %v146 = vmul.f32 %v145, 0.125
      %v147 = vld [vmem:[#allocation3] sm:$0xff]
      %v148 = vsel %vm107, %v147, 0.0
      %v149 = vrot.slane %v148, 4
      %v150 = vadd.f32 %v148, %v149
      %v151 = vrot.slane %v150, 2
      %v152 = vadd.f32 %v150, %v151
      %v153 = vrot.slane %v152, 1
      %v154 = vadd.f32 %v152, %v153
      %v155 = vmul.f32 %v154, 0.125
      %v156 = vsub.f32 0.0, %v155
      %v157 = vld [vmem:[#allocation4] sm:$0xff]
      %v158 = vsel %vm107, %v157, 0.0
      %v159 = vrot.slane %v158, 4
      %v160 = vadd.f32 %v158, %v159
      %v161 = vrot.slane %v160, 2
      %v162 = vadd.f32 %v160, %v161
      %v163 = vrot.slane %v162, 1
      %v164 = vadd.f32 %v162, %v163
      %v165 = vmul.f32 %v164, 0.125
      %v166 = vld [vmem:[#allocation5] sm:$0x1]
      %vm167 = vcmask 0
      %168 = vst.msk [vmem:[#allocation11] sm:$0x1] %vm167, %v146
      %169 = vst.msk [vmem:[#allocation12] sm:$0x1] %vm167, %v146
      %v170 = vadd.f32 %v146, 0.0
      %v171 = vmul.f32 %v156, 0.8
      %173 = vrot.lane.b32.xlu0 %v156, 1
      %v174 = vpop.permute.xlu0 %173
      %vm176 = vcmask 8200
      %177 = vst.msk [vmem:[#allocation11] sm:$0x1] %vm176, %v174
      %179 = vrot.lane.b32.xlu0 %v171, 1
      %v180 = vpop.permute.xlu0 %179
      %182 = vst.msk [vmem:[#allocation12] sm:$0x1] %vm176, %v180
      %v183 = vadd.f32 %v170, %v171
      %v184 = vmul.f32 %v165, -0.08
      %186 = vrot.lane.b32.xlu0 %v165, 2
      %v187 = vpop.permute.xlu0 %186
      %vm189 = vcmask 16400
      %190 = vst.msk [vmem:[#allocation11] sm:$0x1] %vm189, %v187
      %192 = vrot.lane.b32.xlu0 %v184, 2
      %v193 = vpop.permute.xlu0 %192
      %195 = vst.msk [vmem:[#allocation12] sm:$0x1] %vm189, %v193
      %v196 = vadd.f32 %v183, %v184
      %v197 = vmul.f32 %v166, 0.0001
      %v199 = vlaneseq
      %v200 = vshrl.u32 %v199, 7
      %v201 = vsub.s32 0, %v200
      %v202 = vrot.slane %v166, %v201
      %203 = vrot.lane.b32.xlu0 %v202, 3
      %v204 = vpop.permute.xlu0 %203
      %vm206 = vcmask 24600
      %207 = vst.msk [vmem:[#allocation11] sm:$0x1] %vm206, %v204
      %v209 = vlaneseq
      %v210 = vshrl.u32 %v209, 7
      %v211 = vsub.s32 0, %v210
      %v212 = vrot.slane %v197, %v211
      %213 = vrot.lane.b32.xlu0 %v212, 3
      %v214 = vpop.permute.xlu0 %213
      %216 = vst.msk [vmem:[#allocation12] sm:$0x1] %vm206, %v214
      %v217 = vadd.f32 %v196, %v197
      %218 = vst.msk [vmem:[#allocation14] sm:$0x1] %vm167, %v217
    $region37: #{run.1} parent=1 // pred_fallthru
      _
    // Predicated region
    $region38: #{run.1} parent=1 // pred_check
      _
    $region39: #{run.1} parent=1 // pred_check_branch
      %220 = sbr.rel (0) target = $region41
    $region40: #{run.1} parent=1 // pred_region
      %s222 = ssub.s32 16, 16
      %223 = vsyncadd [#allocation8], %s222
      %s225 = sshll.u32 [#allocation11], 4
      %s226 = int_to_ptr.vmem [resolvable:$true] %s225
      %228 = dma.vmem_to_hbm [thread:$0]  %s226, 16, %s5, [#allocation8]
    $region41: #{run.1} parent=1 // pred_fallthru
      _
    // Predicated region
    $region42: #{run.1} parent=1 // pred_check
      _
    $region43: #{run.1} parent=1 // pred_check_branch
      %230 = sbr.rel (0) target = $region45
    $region44: #{run.1} parent=1 // pred_region
      %s232 = ssub.s32 16, 16
      %233 = vsyncadd [#allocation13], %s232
      %s235 = sshll.u32 [#allocation12], 4
      %s236 = int_to_ptr.vmem [resolvable:$true] %s235
      %238 = dma.vmem_to_hbm [thread:$0]  %s236, 16, %s6, [#allocation13]
    $region45: #{run.1} parent=1 // pred_fallthru
      _
    // Predicated region
    $region46: #{run.1} parent=1 // pred_check
      _
    $region47: #{run.1} parent=1 // pred_check_branch
      %240 = sbr.rel (0) target = $region49
    $region48: #{run.1} parent=1 // pred_region
      %s242 = ssub.s32 16, 16
      %243 = vsyncadd [#allocation13], %s242
      %s245 = sshll.u32 [#allocation14], 4
      %s246 = int_to_ptr.vmem [resolvable:$true] %s245
      %248 = dma.vmem_to_hbm [thread:$0]  %s246, 16, %s7, [#allocation13]
    $region49: #{run.1} parent=1 // pred_fallthru
      _
    // Predicated region
    $region50: #{run.1} parent=1 // pred_check
      _
    $region51: #{run.1} parent=1 // pred_check_branch
      %250 = sbr.rel (0) target = $region53
    $region52: #{run.1} parent=1 // pred_region
      %251 = dma.done [#allocation8], 16
    $region53: #{run.1} parent=1 // pred_fallthru
      _
    // Predicated region
    $region54: #{run.1} parent=1 // pred_check
      _
    $region55: #{run.1} parent=1 // pred_check_branch
      %253 = sbr.rel (0) target = $region57
    $region56: #{run.1} parent=1 // pred_region
      %254 = dma.done [#allocation13], 16
    $region57: #{run.1} parent=1 // pred_fallthru
      _
    // Predicated region
    $region58: #{run.1} parent=1 // pred_check
      _
    $region59: #{run.1} parent=1 // pred_check_branch
      %256 = sbr.rel (0) target = $region61
    $region60: #{run.1} parent=1 // pred_region
      %257 = dma.done [#allocation13], 16
    $region61: #{run.1} parent=1 // pred_fallthru
      _
    %258 = vsyncpa [#allocation7], 1
    %259 = vsyncpa [#allocation10], 1
    %260 = vsyncpa [#allocation8], 1
    %261 = vsyncpa [#allocation13], 1

</llo_original>
